<compile_context>
chip_gen: v7x
topology: tpu7x:2x2x1
jax: 0.10.0
libtpu: 0.0.40
codegen_flags: <defaults>
</compile_context>

<pallas_src>
import jax
import jax.numpy as jnp
from jax import lax
from jax.experimental import pallas as pl
from jax.experimental.pallas import tpu as pltpu


def _round_up(x, m):
    return ((x + m - 1) // m) * m


def _cdiv(a, b):
    return -(-a // b)


# ----------------------------------------------------------------------------
# Kernel
# ----------------------------------------------------------------------------
def mlp_decoder_kernel(zi_ref, zj_ref,
                       w1_ref, b1_ref,
                       w2_ref, b2_ref,
                       w3_ref, b3_ref,
                       out_ref):
    # Hadamard product of the two endpoint embeddings (VPU), in input dtype.
    had = zi_ref[...] * zj_ref[...]                              # (tile_m, H)

    # lin1 in transposed orientation: w1 is torch-native [out, in]; contract
    # its `in` axis against had's H axis -> (H, tile_m).  The single XLU
    # transpose the whole pipeline needs is absorbed by this dot_general.
    h = lax.dot_general(w1_ref[...], had,
                        dimension_numbers=(((1,), (1,)), ((), ())),
                        preferred_element_type=jnp.float32)      # (H, tile_m)
    h = jnp.maximum(h + b1_ref[...], 0.0)                        # (H,1) bcast

    # lin2: (H, H) @ (H, tile_m), f32 accumulate.
    h = jnp.dot(w2_ref[...], h.astype(w2_ref.dtype),
                preferred_element_type=jnp.float32)
    h = jnp.maximum(h + b2_ref[...], 0.0)

    # lin3: (8, H) @ (H, tile_m); only row 0 of w3 is real, so only row 0 of
    # the result is used -> lane-dense (1, tile_m) output block.
    out8 = jnp.dot(w3_ref[...], h.astype(w3_ref.dtype),
                   preferred_element_type=jnp.float32)           # (8, tile_m)
    out_ref[...] = (out8[0:1, :] + b3_ref[0, 0]).astype(out_ref.dtype)


# ----------------------------------------------------------------------------
# Tiling / VMEM budgeting helpers
# ----------------------------------------------------------------------------
def _vmem_bytes(tile_m, H, in_itemsize):
    """Rough per-step VMEM working-set estimate (bytes), double-buffered."""
    inputs = 2 * 2 * tile_m * H * in_itemsize            # z_i, z_j tiles
    weights = 2 * (2 * H * H + 8 * H) * in_itemsize + 2 * 2 * H * 4
    output = 2 * 1 * tile_m * 4
    acts = 6 * tile_m * H * 4                            # transpose + f32 acts
    return inputs + weights + output + acts


def _vmem_capacity_bytes():
    try:
        cap = int(pltpu.get_tpu_info().vmem_capacity_bytes)
        if cap > 0:
            return cap
    except Exception:
        pass
    return 64 << 20          # assume the smallest (v7x per-core) if unknown


def _choose_tile(N, H, in_itemsize, vmem_cap):
    # Target ~2 MiB of input payload per grid step so the fixed per-step
    # pipeline overhead (~0.35 us) is negligible against HBM time.
    bytes_per_row = max(1, 2 * H * in_itemsize)
    tile = _round_up(max(256, (2 << 20) // bytes_per_row), 128)
    tile = min(tile, 8192)
    # Keep the working set comfortably inside VMEM (works on v5e/v6e/v7x).
    while tile > 128 and _vmem_bytes(tile, H, in_itemsize) > vmem_cap // 2:
        tile = max(128, _round_up(tile // 2, 128))
    # MXU-friendly rounding for larger tiles (v5e's 4x128 column groups).
    if tile >= 512:
        tile = _round_up(tile, 512)
    # Don't overshoot N by more than one lane group.
    tile = min(tile, max(128, _round_up(N, 128)))
    # Prefer an even number of grid steps so both v7x TensorCores get equal
    # shares under dimension_semantics=("parallel",).
    steps = _cdiv(N, tile)
    if steps > 1 and steps % 2 == 1:
        cand = max(128, _round_up(_cdiv(N, steps + 1), 128))
        if _cdiv(N, cand) % 2 == 0:
            tile = cand
    return tile


# ----------------------------------------------------------------------------
# Wrapper
# ----------------------------------------------------------------------------
def mlp_decoder(z_i, z_j, params, *, tile_m=None, compute_dtype=None):
    """GraphSAGE MLP link decoder.

    z_i, z_j      : [N, H] endpoint embeddings for N edges.
    params        : torch-native layouts: w1, w2 [out,in]=[H,H]; b1, b2 [H,1];
                    w3 [1,H]; b3 [1,1].
    compute_dtype : optional reduced-precision path (e.g. jnp.bfloat16) for
                    inputs/weights; accumulation + output stay float32.
    Returns       : [N] float32 (matches torch `.view(-1)`).
    """
    N, H = z_i.shape
    w1, b1 = params["w1"], params["b1"]
    w2, b2 = params["w2"], params["b2"]
    w3, b3 = params["w3"], params["b3"]

    if compute_dtype is not None:
        z_i = z_i.astype(compute_dtype)
        z_j = z_j.astype(compute_dtype)
        w1 = w1.astype(compute_dtype)
        w2 = w2.astype(compute_dtype)
        w3 = w3.astype(compute_dtype)
    in_itemsize = z_i.dtype.itemsize

    vmem_cap = _vmem_capacity_bytes()
    if tile_m is None:
        tile_m = _choose_tile(N, H, in_itemsize, vmem_cap)
    else:
        tile_m = max(128, _round_up(tile_m, 128))
        while tile_m > 128 and _vmem_bytes(tile_m, H, in_itemsize) > vmem_cap // 2:
            tile_m = max(128, _round_up(tile_m // 2, 128))
        tile_m = min(tile_m, max(128, _round_up(N, 128)))

    # No jnp.pad: the last grid step handles the partial block (masked output
    # store, garbage-but-independent tail rows sliced off at the end).
    grid = (_cdiv(N, tile_m),)

    # lin3 weight zero-padded to 8 rows -> well-shaped MXU LHS; row 0 is real.
    w3_pad = jnp.zeros((8, H), w3.dtype).at[0:1, :].set(w3)

    row_spec = pl.BlockSpec((tile_m, H), lambda i: (i, 0))

    # Grid-invariant operands: DMA'd once.  For large H, single-buffer them to
    # halve their VMEM footprint (matters on v7x's 64 MiB per-core VMEM).
    single_buffer_weights = H * H * in_itemsize >= (1 << 20)

    def invariant(shape):
        idx = lambda i: (0,) * len(shape)
        if single_buffer_weights:
            try:
                return pl.BlockSpec(shape, idx, pipeline_mode=pl.Buffered(1))
            except Exception:
                pass
        return pl.BlockSpec(shape, idx)

    vmem_limit = int(min(int(vmem_cap * 0.75),
                         max(16 << 20, 2 * _vmem_bytes(tile_m, H, in_itemsize))))

    # Advisory cost estimate so XLA can schedule around the custom call.
    flops = int(N) * (4 * H * H + 7 * H)
    bytes_accessed = int(z_i.nbytes + z_j.nbytes + w1.nbytes + w2.nbytes
                         + w3_pad.nbytes + b1.nbytes + b2.nbytes + b3.nbytes
                         + N * 4)

    out_row = pl.pallas_call(
        mlp_decoder_kernel,
        out_shape=jax.ShapeDtypeStruct((1, N), jnp.float32),
        grid_spec=pltpu.PrefetchScalarGridSpec(
            num_scalar_prefetch=0,
            grid=grid,
            in_specs=[
                row_spec,                     # z_i tile   (tile_m, H)
                row_spec,                     # z_j tile   (tile_m, H)
                invariant((H, H)),            # w1 [out, in]
                invariant((H, 1)),            # b1 column
                invariant((H, H)),            # w2 [out, in]
                invariant((H, 1)),            # b2 column
                invariant((8, H)),            # w3 (zero-padded rows)
                pl.BlockSpec(memory_space=pltpu.MemorySpace.SMEM),  # b3 scalar
            ],
            # Lane-dense output block (last dim = tile_m, multiple of 128).
            out_specs=pl.BlockSpec((1, tile_m), lambda i: (0, i)),
        ),
        compiler_params=pltpu.CompilerParams(
            dimension_semantics=("parallel",),
            vmem_limit_bytes=vmem_limit,
        ),
        cost_estimate=pl.CostEstimate(flops=flops, transcendentals=0,
                                      bytes_accessed=bytes_accessed),
    )(z_i, z_j, w1, b1, w2, b2, w3_pad, b3)

    return out_row.reshape(-1)[:N]                 # matches torch .view(-1)


# ----------------------------------------------------------------------------
# Parameters / reference
# ----------------------------------------------------------------------------
def init_params(key, hidden_channels):
    """Deterministic synthetic parameters (PyTorch Linear init ranges).

    Torch-native layouts: w* are [out, in]; b1/b2 are stored as [H, 1] columns
    (lane-broadcast friendly for the transposed pipeline); b3 is [1, 1].
    """
    H = hidden_channels
    k = jax.random.split(key, 6)
    scale = 1.0 / jnp.sqrt(H)
    w1 = jax.random.uniform(k[0], (H, H), jnp.float32, -scale, scale)
    b1 = jax.random.uniform(k[1], (H, 1), jnp.float32, -scale, scale)
    w2 = jax.random.uniform(k[2], (H, H), jnp.float32, -scale, scale)
    b2 = jax.random.uniform(k[3], (H, 1), jnp.float32, -scale, scale)
    w3 = jax.random.uniform(k[4], (1, H), jnp.float32, -scale, scale)
    b3 = jax.random.uniform(k[5], (1, 1), jnp.float32, -scale, scale)
    return dict(w1=w1, b1=b1, w2=w2, b2=b2, w3=w3, b3=b3)


def reference(z_i, z_j, p):
    h = z_i * z_j
    h = jnp.maximum(h @ p["w1"].T + p["b1"].T, 0.0)
    h = jnp.maximum(h @ p["w2"].T + p["b2"].T, 0.0)
    return (h @ p["w3"].T + p["b3"]).reshape(-1)


if __name__ == "__main__":
    key = jax.random.PRNGKey(0)
    k_zi, k_zj, k_p = jax.random.split(key, 3)

    # Small edge batch with N deliberately NOT a multiple of the tile size.
    N, H = 300, 32
    z_i = jax.random.normal(k_zi, (N, H), jnp.float32)
    z_j = jax.random.normal(k_zj, (N, H), jnp.float32)
    params = init_params(k_p, H)

    ref = reference(z_i, z_j, params)

    # f32 path: auto-chosen large tile and an explicit multi-step grid.
    for tm in (None, 128):
        out = jax.block_until_ready(mlp_decoder(z_i, z_j, params, tile_m=tm))
        assert out.shape == (N,)
        assert jnp.allclose(out, ref, atol=1e-3, rtol=1e-3), (
            tm, float(jnp.max(jnp.abs(out - ref))))

    # Reduced-precision path (halves HBM traffic on v6e/v7x); f32 accumulate.
    out_bf16 = jax.block_until_ready(
        mlp_decoder(z_i, z_j, params, compute_dtype=jnp.bfloat16))
    assert out_bf16.shape == (N,)
    assert jnp.allclose(out_bf16, ref, atol=2.5e-1, rtol=5e-2), float(
        jnp.max(jnp.abs(out_bf16 - ref)))

    print("KERNEL_OK")
</pallas_src>

<mosaic_0001>
module attributes {stable_mosaic.version = 11 : i64} {
  func.func @mlp_decoder_kernel(%arg0: i32, %arg1: memref<384x32xf32, #tpu.memory_space<vmem>>, %arg2: memref<384x32xf32, #tpu.memory_space<vmem>>, %arg3: memref<32x32xf32, #tpu.memory_space<vmem>>, %arg4: memref<32x1xf32, #tpu.memory_space<vmem>>, %arg5: memref<32x32xf32, #tpu.memory_space<vmem>>, %arg6: memref<32x1xf32, #tpu.memory_space<vmem>>, %arg7: memref<8x32xf32, #tpu.memory_space<vmem>>, %arg8: memref<1x1xf32, #tpu.memory_space<smem>>, %arg9: memref<1x384xf32, #tpu.memory_space<vmem>>) attributes {dimension_semantics = [#tpu.dimension_semantics<parallel>], iteration_bounds = array<i64: 1>, scalar_prefetch = 0 : i64, scratch_operands = 0 : i64, tpu.core_type = #tpu.core_type<tc>, window_params = [{transform_indices = @transform_0, window_bounds = array<i64: 384, 32>}, {transform_indices = @transform_1, window_bounds = array<i64: 384, 32>}, {pipeline_mode = #tpu.pipeline_mode<synchronous>, transform_indices = @transform_2, window_bounds = array<i64: 32, 32>}, {pipeline_mode = #tpu.pipeline_mode<synchronous>, transform_indices = @transform_3, window_bounds = array<i64: 32, 1>}, {pipeline_mode = #tpu.pipeline_mode<synchronous>, transform_indices = @transform_4, window_bounds = array<i64: 32, 32>}, {pipeline_mode = #tpu.pipeline_mode<synchronous>, transform_indices = @transform_5, window_bounds = array<i64: 32, 1>}, {pipeline_mode = #tpu.pipeline_mode<synchronous>, transform_indices = @transform_6, window_bounds = array<i64: 8, 32>}, {transform_indices = @transform_7, window_bounds = array<i64: 1, 1>}, {transform_indices = @transform_8, window_bounds = array<i64: 1, 384>}]} {
    %c0 = arith.constant 0 : index
    %c0_0 = arith.constant 0 : index
    %0 = vector.load %arg1[%c0, %c0_0] : memref<384x32xf32, #tpu.memory_space<vmem>>, vector<384x32xf32>
    %c0_1 = arith.constant 0 : index
    %c0_2 = arith.constant 0 : index
    %1 = vector.load %arg2[%c0_1, %c0_2] : memref<384x32xf32, #tpu.memory_space<vmem>>, vector<384x32xf32>
    %2 = arith.mulf %0, %1 : vector<384x32xf32>
    %c0_3 = arith.constant 0 : index
    %c0_4 = arith.constant 0 : index
    %3 = vector.load %arg3[%c0_3, %c0_4] : memref<32x32xf32, #tpu.memory_space<vmem>>, vector<32x32xf32>
    %cst = arith.constant dense<0.000000e+00> : vector<32x384xf32>
    %4 = tpu.matmul %3, %2, %cst {dimension_numbers = #tpu.dot_dimension_numbers<[1], [1], [0], [0], [0, 0, 1, 0], [], []>} : vector<32x32xf32>, vector<384x32xf32>, vector<32x384xf32> -> vector<32x384xf32>
    %c0_5 = arith.constant 0 : index
    %c0_6 = arith.constant 0 : index
    %5 = vector.load %arg4[%c0_5, %c0_6] : memref<32x1xf32, #tpu.memory_space<vmem>>, vector<32x1xf32>
    %6 = vector.broadcast %5 : vector<32x1xf32> to vector<32x384xf32>
    %7 = arith.addf %4, %6 : vector<32x384xf32>
    %cst_7 = arith.constant 0.000000e+00 : f32
    %8 = vector.broadcast %cst_7 : f32 to vector<32x384xf32>
    %9 = arith.maximumf %7, %8 : vector<32x384xf32>
    %c0_8 = arith.constant 0 : index
    %c0_9 = arith.constant 0 : index
    %10 = vector.load %arg5[%c0_8, %c0_9] : memref<32x32xf32, #tpu.memory_space<vmem>>, vector<32x32xf32>
    %cst_10 = arith.constant dense<0.000000e+00> : vector<32x384xf32>
    %11 = tpu.matmul %10, %9, %cst_10 {dimension_numbers = #tpu.dot_dimension_numbers<[1], [0], [0], [1], [0, 0, 1, 1], [], []>} : vector<32x32xf32>, vector<32x384xf32>, vector<32x384xf32> -> vector<32x384xf32>
    %c0_11 = arith.constant 0 : index
    %c0_12 = arith.constant 0 : index
    %12 = vector.load %arg6[%c0_11, %c0_12] : memref<32x1xf32, #tpu.memory_space<vmem>>, vector<32x1xf32>
    %13 = vector.broadcast %12 : vector<32x1xf32> to vector<32x384xf32>
    %14 = arith.addf %11, %13 : vector<32x384xf32>
    %cst_13 = arith.constant 0.000000e+00 : f32
    %15 = vector.broadcast %cst_13 : f32 to vector<32x384xf32>
    %16 = arith.maximumf %14, %15 : vector<32x384xf32>
    %c0_14 = arith.constant 0 : index
    %c0_15 = arith.constant 0 : index
    %17 = vector.load %arg7[%c0_14, %c0_15] : memref<8x32xf32, #tpu.memory_space<vmem>>, vector<8x32xf32>
    %cst_16 = arith.constant dense<0.000000e+00> : vector<8x384xf32>
    %18 = tpu.matmul %17, %16, %cst_16 {dimension_numbers = #tpu.dot_dimension_numbers<[1], [0], [0], [1], [0, 0, 1, 1], [], []>} : vector<8x32xf32>, vector<32x384xf32>, vector<8x384xf32> -> vector<8x384xf32>
    %19 = vector.extract_strided_slice %18 {offsets = [0, 0], sizes = [1, 384], strides = [1, 1]} : vector<8x384xf32> to vector<1x384xf32>
    %c0_17 = arith.constant 0 : index
    %c0_18 = arith.constant 0 : index
    %20 = memref.load %arg8[%c0_17, %c0_18] : memref<1x1xf32, #tpu.memory_space<smem>>
    %21 = vector.broadcast %20 : f32 to vector<1x384xf32>
    %22 = arith.addf %19, %21 : vector<1x384xf32>
    %c0_19 = arith.constant 0 : index
    %c0_20 = arith.constant 0 : index
    %23 = vector.load %arg9[%c0_19, %c0_20] : memref<1x384xf32, #tpu.memory_space<vmem>>, vector<1x384xf32>
    tpu.vector_store %arg9[%c0_19, %c0_20], %22 {strides = array<i32>} : memref<1x384xf32, #tpu.memory_space<vmem>>, vector<1x384xf32>,
    return
  }
  func.func @transform_0(%arg0: i32) -> (i32, i32) {
    %c0_i32 = arith.constant 0 : i32
    %c0_i32_0 = arith.constant 0 : i32
    return %arg0, %c0_i32 : i32, i32
  }
  func.func @transform_1(%arg0: i32) -> (i32, i32) {
    %c0_i32 = arith.constant 0 : i32
    %c0_i32_0 = arith.constant 0 : i32
    return %arg0, %c0_i32 : i32, i32
  }
  func.func @transform_2(%arg0: i32) -> (i32, i32) {
    %c0_i32 = arith.constant 0 : i32
    %c0_i32_0 = arith.constant 0 : i32
    %c0_i32_1 = arith.constant 0 : i32
    return %c0_i32, %c0_i32_0 : i32, i32
  }
  func.func @transform_3(%arg0: i32) -> (i32, i32) {
    %c0_i32 = arith.constant 0 : i32
    %c0_i32_0 = arith.constant 0 : i32
    %c0_i32_1 = arith.constant 0 : i32
    return %c0_i32, %c0_i32_0 : i32, i32
  }
  func.func @transform_4(%arg0: i32) -> (i32, i32) {
    %c0_i32 = arith.constant 0 : i32
    %c0_i32_0 = arith.constant 0 : i32
    %c0_i32_1 = arith.constant 0 : i32
    return %c0_i32, %c0_i32_0 : i32, i32
  }
  func.func @transform_5(%arg0: i32) -> (i32, i32) {
    %c0_i32 = arith.constant 0 : i32
    %c0_i32_0 = arith.constant 0 : i32
    %c0_i32_1 = arith.constant 0 : i32
    return %c0_i32, %c0_i32_0 : i32, i32
  }
  func.func @transform_6(%arg0: i32) -> (i32, i32) {
    %c0_i32 = arith.constant 0 : i32
    %c0_i32_0 = arith.constant 0 : i32
    %c0_i32_1 = arith.constant 0 : i32
    return %c0_i32, %c0_i32_0 : i32, i32
  }
  func.func @transform_7(%arg0: i32) -> (i32, i32) {
    %c0_i32 = arith.constant 0 : i32
    %c0_i32_0 = arith.constant 0 : i32
    %c0_i32_1 = arith.constant 0 : i32
    return %c0_i32, %c0_i32_0 : i32, i32
  }
  func.func @transform_8(%arg0: i32) -> (i32, i32) {
    %c0_i32 = arith.constant 0 : i32
    %c0_i32_0 = arith.constant 0 : i32
    return %c0_i32, %arg0 : i32, i32
  }
}

</mosaic_0001>

<llo_original>
// kernel: tpu_custom_call.1
$region0: #{tpu_custom_call.1}
  #allocation0 [shape = 'u32[]', space=smem, size = 0x4, offset = 0x4, fixed_abs, tag = 'smem constant byte address 0x4 - core index']
  #allocation1 [shape = 'u32[144,128]{1,0:T(1,128)}', space=vmem, size = 0x12000, scoped, tag = 'internal scratch']
  #allocation2 [shape = 'f32[1,1]{1,0:T(1,128)S(6)}', space=smem, size = 0x200, scoped, tag = 'scoped memory for tpu_custom_call.1']
  %s0 = inlined_call_operand.vmem [shape: f32[300,32], index: 0, kind: input, shape index: {}]
  %s1 = inlined_call_operand.vmem [shape: f32[300,32], index: 1, kind: input, shape index: {}]
  %s2 = inlined_call_operand.vmem [shape: f32[32,32], index: 2, kind: input, shape index: {}]
  %s3 = inlined_call_operand.vmem [shape: f32[32,1], index: 3, kind: input, shape index: {}]
  %s4 = inlined_call_operand.vmem [shape: f32[32,32], index: 4, kind: input, shape index: {}]
  %s5 = inlined_call_operand.vmem [shape: f32[32,1], index: 5, kind: input, shape index: {}]
  %s6 = inlined_call_operand.vmem [shape: f32[8,32], index: 6, kind: input, shape index: {}]
  %s7 = inlined_call_operand.<no memory space> [shape: f32[1,1], index: 7, kind: input, shape index: {}]
  %s8 = inlined_call_operand.hbm [shape: f32[1,300], index: 8, kind: output, shape index: {}]
  %s9 = sld [smem:[#allocation0]]
  $region42: #{tpu_custom_call.1} parent=0
    _
  %s11 = ssub.s32 1, %s9
  %s12 = scalar_select 0, %s11, %s9
  %13 = sst [smem:[#allocation2]] %s7
  $region1: #{tpu_custom_call.1} parent=0
    #allocation3 [shape = 'u8[1536]{0}', space=vmem, size = 0x800, scoped, tag = 'output window, operand 0, single buffered']
    #allocation4 [shape = 's32[1]{0}', space=sflag, size = 0x4, scoped, tag = 'scoped memory for tpu_custom_call.1']
    %14 = vsyncpa [#allocation4], 0
    // Predicated region
    $region2: #{tpu_custom_call.1} parent=1 // pred_check
      _
    $region3: #{tpu_custom_call.1} parent=1 // pred_check_branch
      %16 = sbr.rel (0) target = $region5
    $region4: #{tpu_custom_call.1} parent=1 // pred_region
      _
    $region5: #{tpu_custom_call.1} parent=1 // pred_fallthru
      _
    // Predicated region
    $region6: #{tpu_custom_call.1} parent=1 // pred_check
      _
    $region7: #{tpu_custom_call.1} parent=1 // pred_check_branch
      %18 = sbr.rel (0) target = $region9
    $region8: #{tpu_custom_call.1} parent=1 // pred_region
      _
    $region9: #{tpu_custom_call.1} parent=1 // pred_fallthru
      _
    // Predicated region
    $region10: #{tpu_custom_call.1} parent=1 // pred_check
      _
    $region11: #{tpu_custom_call.1} parent=1 // pred_check_branch
      %20 = sbr.rel (0) target = $region13
    $region12: #{tpu_custom_call.1} parent=1 // pred_region
      _
    $region13: #{tpu_custom_call.1} parent=1 // pred_fallthru
      _
    // Predicated region
    $region14: #{tpu_custom_call.1} parent=1 // pred_check
      _
    $region15: #{tpu_custom_call.1} parent=1 // pred_check_branch
      %22 = sbr.rel (0) target = $region17
    $region16: #{tpu_custom_call.1} parent=1 // pred_region
      _
    $region17: #{tpu_custom_call.1} parent=1 // pred_fallthru
      _
    // Predicated region
    $region18: #{tpu_custom_call.1} parent=1 // pred_check
      _
    $region19: #{tpu_custom_call.1} parent=1 // pred_check_branch
      %24 = sbr.rel (0) target = $region21
    $region20: #{tpu_custom_call.1} parent=1 // pred_region
      _
    $region21: #{tpu_custom_call.1} parent=1 // pred_fallthru
      _
    // Predicated region
    $region22: #{tpu_custom_call.1} parent=1 // pred_check
      _
    $region23: #{tpu_custom_call.1} parent=1 // pred_check_branch
      %26 = sbr.rel (0) target = $region25
    $region24: #{tpu_custom_call.1} parent=1 // pred_region
      _
    $region25: #{tpu_custom_call.1} parent=1 // pred_fallthru
      _
    // Predicated region
    $region26: #{tpu_custom_call.1} parent=1 // pred_check
      _
    $region27: #{tpu_custom_call.1} parent=1 // pred_check_branch
      %28 = sbr.rel (0) target = $region29
    $region28: #{tpu_custom_call.1} parent=1 // pred_region
      _
    $region29: #{tpu_custom_call.1} parent=1 // pred_fallthru
      _
    // Predicated region
    $region30: #{tpu_custom_call.1} parent=1 // pred_check
      _
    $region31: #{tpu_custom_call.1} parent=1 // pred_check_branch
      %30 = sbr.rel (0) target = $region33
    $region32: #{tpu_custom_call.1} parent=1 // pred_region
      _
    $region33: #{tpu_custom_call.1} parent=1 // pred_fallthru
      _
    %v31 = vld [vmem:[%s0] sm:$0xff]
    %v32 = vld [vmem:[%s0 + $0x8] sm:$0xff]
    %v33 = vld [vmem:[%s0 + $0x10] sm:$0xff]
    %v34 = vld [vmem:[%s0 + $0x18] sm:$0xff]
    %v35 = vld [vmem:[%s0 + $0x20] sm:$0xff]
    %v36 = vld [vmem:[%s0 + $0x28] sm:$0xff]
    %v37 = vld [vmem:[%s0 + $0x30] sm:$0xff]
    %v38 = vld [vmem:[%s0 + $0x38] sm:$0xff]
    %v39 = vld [vmem:[%s0 + $0x40] sm:$0xff]
    %v40 = vld [vmem:[%s0 + $0x48] sm:$0xff]
    %v41 = vld [vmem:[%s0 + $0x50] sm:$0xff]
    %v42 = vld [vmem:[%s0 + $0x58] sm:$0xff]
    %v43 = vld [vmem:[%s0 + $0x60] sm:$0xff]
    %v44 = vld [vmem:[%s0 + $0x68] sm:$0xff]
    %v45 = vld [vmem:[%s0 + $0x70] sm:$0xff]
    %v46 = vld [vmem:[%s0 + $0x78] sm:$0xff]
    %v47 = vld [vmem:[%s0 + $0x80] sm:$0xff]
    %v48 = vld [vmem:[%s0 + $0x88] sm:$0xff]
    %v49 = vld [vmem:[%s0 + $0x90] sm:$0xff]
    %v50 = vld [vmem:[%s0 + $0x98] sm:$0xff]
    %v51 = vld [vmem:[%s0 + $0xa0] sm:$0xff]
    %v52 = vld [vmem:[%s0 + $0xa8] sm:$0xff]
    %v53 = vld [vmem:[%s0 + $0xb0] sm:$0xff]
    %v54 = vld [vmem:[%s0 + $0xb8] sm:$0xff]
    %v55 = vld [vmem:[%s0 + $0xc0] sm:$0xff]
    %v56 = vld [vmem:[%s0 + $0xc8] sm:$0xff]
    %v57 = vld [vmem:[%s0 + $0xd0] sm:$0xff]
    %v58 = vld [vmem:[%s0 + $0xd8] sm:$0xff]
    %v59 = vld [vmem:[%s0 + $0xe0] sm:$0xff]
    %v60 = vld [vmem:[%s0 + $0xe8] sm:$0xff]
    %v61 = vld [vmem:[%s0 + $0xf0] sm:$0xff]
    %v62 = vld [vmem:[%s0 + $0xf8] sm:$0xff]
    %v63 = vld [vmem:[%s0 + $0x100] sm:$0xff]
    %v64 = vld [vmem:[%s0 + $0x108] sm:$0xff]
    %v65 = vld [vmem:[%s0 + $0x110] sm:$0xff]
    %v66 = vld [vmem:[%s0 + $0x118] sm:$0xff]
    %v67 = vld [vmem:[%s0 + $0x120] sm:$0xff]
    %v68 = vld [vmem:[%s0 + $0x128] sm:$0xff]
    %v69 = vld [vmem:[%s0 + $0x130] sm:$0xff]
    %v70 = vld [vmem:[%s0 + $0x138] sm:$0xff]
    %v71 = vld [vmem:[%s0 + $0x140] sm:$0xff]
    %v72 = vld [vmem:[%s0 + $0x148] sm:$0xff]
    %v73 = vld [vmem:[%s0 + $0x150] sm:$0xff]
    %v74 = vld [vmem:[%s0 + $0x158] sm:$0xff]
    %v75 = vld [vmem:[%s0 + $0x160] sm:$0xff]
    %v76 = vld [vmem:[%s0 + $0x168] sm:$0xff]
    %v77 = vld [vmem:[%s0 + $0x170] sm:$0xff]
    %v78 = vld [vmem:[%s0 + $0x178] sm:$0xff]
    %v79 = vld [vmem:[%s1] sm:$0xff]
    %v80 = vld [vmem:[%s1 + $0x8] sm:$0xff]
    %v81 = vld [vmem:[%s1 + $0x10] sm:$0xff]
    %v82 = vld [vmem:[%s1 + $0x18] sm:$0xff]
    %v83 = vld [vmem:[%s1 + $0x20] sm:$0xff]
    %v84 = vld [vmem:[%s1 + $0x28] sm:$0xff]
    %v85 = vld [vmem:[%s1 + $0x30] sm:$0xff]
    %v86 = vld [vmem:[%s1 + $0x38] sm:$0xff]
    %v87 = vld [vmem:[%s1 + $0x40] sm:$0xff]
    %v88 = vld [vmem:[%s1 + $0x48] sm:$0xff]
    %v89 = vld [vmem:[%s1 + $0x50] sm:$0xff]
    %v90 = vld [vmem:[%s1 + $0x58] sm:$0xff]
    %v91 = vld [vmem:[%s1 + $0x60] sm:$0xff]
    %v92 = vld [vmem:[%s1 + $0x68] sm:$0xff]
    %v93 = vld [vmem:[%s1 + $0x70] sm:$0xff]
    %v94 = vld [vmem:[%s1 + $0x78] sm:$0xff]
    %v95 = vld [vmem:[%s1 + $0x80] sm:$0xff]
    %v96 = vld [vmem:[%s1 + $0x88] sm:$0xff]
    %v97 = vld [vmem:[%s1 + $0x90] sm:$0xff]
    %v98 = vld [vmem:[%s1 + $0x98] sm:$0xff]
    %v99 = vld [vmem:[%s1 + $0xa0] sm:$0xff]
    %v100 = vld [vmem:[%s1 + $0xa8] sm:$0xff]
    %v101 = vld [vmem:[%s1 + $0xb0] sm:$0xff]
    %v102 = vld [vmem:[%s1 + $0xb8] sm:$0xff]
    %v103 = vld [vmem:[%s1 + $0xc0] sm:$0xff]
    %v104 = vld [vmem:[%s1 + $0xc8] sm:$0xff]
    %v105 = vld [vmem:[%s1 + $0xd0] sm:$0xff]
    %v106 = vld [vmem:[%s1 + $0xd8] sm:$0xff]
    %v107 = vld [vmem:[%s1 + $0xe0] sm:$0xff]
    %v108 = vld [vmem:[%s1 + $0xe8] sm:$0xff]
    %v109 = vld [vmem:[%s1 + $0xf0] sm:$0xff]
    %v110 = vld [vmem:[%s1 + $0xf8] sm:$0xff]
    %v111 = vld [vmem:[%s1 + $0x100] sm:$0xff]
    %v112 = vld [vmem:[%s1 + $0x108] sm:$0xff]
    %v113 = vld [vmem:[%s1 + $0x110] sm:$0xff]
    %v114 = vld [vmem:[%s1 + $0x118] sm:$0xff]
    %v115 = vld [vmem:[%s1 + $0x120] sm:$0xff]
    %v116 = vld [vmem:[%s1 + $0x128] sm:$0xff]
    %v117 = vld [vmem:[%s1 + $0x130] sm:$0xff]
    %v118 = vld [vmem:[%s1 + $0x138] sm:$0xff]
    %v119 = vld [vmem:[%s1 + $0x140] sm:$0xff]
    %v120 = vld [vmem:[%s1 + $0x148] sm:$0xff]
    %v121 = vld [vmem:[%s1 + $0x150] sm:$0xff]
    %v122 = vld [vmem:[%s1 + $0x158] sm:$0xff]
    %v123 = vld [vmem:[%s1 + $0x160] sm:$0xff]
    %v124 = vld [vmem:[%s1 + $0x168] sm:$0xff]
    %v125 = vld [vmem:[%s1 + $0x170] sm:$0xff]
    %v126 = vld [vmem:[%s1 + $0x178] sm:$0xff]
    %v127 = vmul.f32 %v31, %v79
    %v128 = vmul.f32 %v32, %v80
    %v129 = vmul.f32 %v33, %v81
    %v130 = vmul.f32 %v34, %v82
    %v131 = vmul.f32 %v35, %v83
    %v132 = vmul.f32 %v36, %v84
    %v133 = vmul.f32 %v37, %v85
    %v134 = vmul.f32 %v38, %v86
    %v135 = vmul.f32 %v39, %v87
    %v136 = vmul.f32 %v40, %v88
    %v137 = vmul.f32 %v41, %v89
    %v138 = vmul.f32 %v42, %v90
    %v139 = vmul.f32 %v43, %v91
    %v140 = vmul.f32 %v44, %v92
    %v141 = vmul.f32 %v45, %v93
    %v142 = vmul.f32 %v46, %v94
    %v143 = vmul.f32 %v47, %v95
    %v144 = vmul.f32 %v48, %v96
    %v145 = vmul.f32 %v49, %v97
    %v146 = vmul.f32 %v50, %v98
    %v147 = vmul.f32 %v51, %v99
    %v148 = vmul.f32 %v52, %v100
    %v149 = vmul.f32 %v53, %v101
    %v150 = vmul.f32 %v54, %v102
    %v151 = vmul.f32 %v55, %v103
    %v152 = vmul.f32 %v56, %v104
    %v153 = vmul.f32 %v57, %v105
    %v154 = vmul.f32 %v58, %v106
    %v155 = vmul.f32 %v59, %v107
    %v156 = vmul.f32 %v60, %v108
    %v157 = vmul.f32 %v61, %v109
    %v158 = vmul.f32 %v62, %v110
    %v159 = vmul.f32 %v63, %v111
    %v160 = vmul.f32 %v64, %v112
    %v161 = vmul.f32 %v65, %v113
    %v162 = vmul.f32 %v66, %v114
    %v163 = vmul.f32 %v67, %v115
    %v164 = vmul.f32 %v68, %v116
    %v165 = vmul.f32 %v69, %v117
    %v166 = vmul.f32 %v70, %v118
    %v167 = vmul.f32 %v71, %v119
    %v168 = vmul.f32 %v72, %v120
    %v169 = vmul.f32 %v73, %v121
    %v170 = vmul.f32 %v74, %v122
    %v171 = vmul.f32 %v75, %v123
    %v172 = vmul.f32 %v76, %v124
    %v173 = vmul.f32 %v77, %v125
    %v174 = vmul.f32 %v78, %v126
    %v175 = vld [vmem:[%s2] sm:$0xff]
    %v176 = vld [vmem:[%s2 + $0x8] sm:$0xff]
    %v177 = vld [vmem:[%s2 + $0x10] sm:$0xff]
    %v178 = vld [vmem:[%s2 + $0x18] sm:$0xff]
    %v179 = vld [vmem:[%s3] sm:$0xff]
    %v180 = vld [vmem:[%s3 + $0x8] sm:$0xff]
    %v181 = vld [vmem:[%s3 + $0x10] sm:$0xff]
    %v182 = vld [vmem:[%s3 + $0x18] sm:$0xff]
    %184 = vset.pattern.permute.xlu0 0
    %185 = vperm.xlu0 %184, %v179
    %v186 = vpop.permute.xlu0 %185
    %189 = vset.pattern.permute.xlu0 0
    %190 = vperm.xlu0 %189, %v180
    %v191 = vpop.permute.xlu0 %190
    %194 = vset.pattern.permute.xlu0 0
    %195 = vperm.xlu0 %194, %v181
    %v196 = vpop.permute.xlu0 %195
    %199 = vset.pattern.permute.xlu0 0
    %200 = vperm.xlu0 %199, %v182
    %v201 = vpop.permute.xlu0 %200
    %vm203 = vcmask 261120
    %v205 = vsel %vm203, %v175, 0
    %v208 = vsel %vm203, %v176, 0
    %v211 = vsel %vm203, %v177, 0
    %v214 = vsel %vm203, %v178, 0
    %v217 = vsel %vm203, %v127, 0
    %v220 = vsel %vm203, %v128, 0
    %v223 = vsel %vm203, %v129, 0
    %v226 = vsel %vm203, %v130, 0
    %v229 = vsel %vm203, %v131, 0
    %v232 = vsel %vm203, %v132, 0
    %v235 = vsel %vm203, %v133, 0
    %v238 = vsel %vm203, %v134, 0
    %v241 = vsel %vm203, %v135, 0
    %v244 = vsel %vm203, %v136, 0
    %v247 = vsel %vm203, %v137, 0
    %v250 = vsel %vm203, %v138, 0
    %v253 = vsel %vm203, %v139, 0
    %v256 = vsel %vm203, %v140, 0
    %v259 = vsel %vm203, %v141, 0
    %v262 = vsel %vm203, %v142, 0
    %v265 = vsel %vm203, %v143, 0
    %v268 = vsel %vm203, %v144, 0
    %v271 = vsel %vm203, %v145, 0
    %v274 = vsel %vm203, %v146, 0
    %v277 = vsel %vm203, %v147, 0
    %v280 = vsel %vm203, %v148, 0
    %v283 = vsel %vm203, %v149, 0
    %v286 = vsel %vm203, %v150, 0
    %v289 = vsel %vm203, %v151, 0
    %v292 = vsel %vm203, %v152, 0
    %v295 = vsel %vm203, %v153, 0
    %v298 = vsel %vm203, %v154, 0
    %v301 = vsel %vm203, %v155, 0
    %v304 = vsel %vm203, %v156, 0
    %v307 = vsel %vm203, %v157, 0
    %v310 = vsel %vm203, %v158, 0
    %v313 = vsel %vm203, %v159, 0
    %v316 = vsel %vm203, %v160, 0
    %v319 = vsel %vm203, %v161, 0
    %v322 = vsel %vm203, %v162, 0
    %v325 = vsel %vm203, %v163, 0
    %v328 = vsel %vm203, %v164, 0
    %v331 = vsel %vm203, %v165, 0
    %v334 = vsel %vm203, %v166, 0
    %v337 = vsel %vm203, %v167, 0
    %v340 = vsel %vm203, %v168, 0
    %v343 = vsel %vm203, %v169, 0
    %v346 = vsel %vm203, %v170, 0
    %v349 = vsel %vm203, %v171, 0
    %v352 = vsel %vm203, %v172, 0
    %v355 = vsel %vm203, %v173, 0
    %v358 = vsel %vm203, %v174, 0
    %360 = vmatprep.subr.mxu0 0.0
    %361 = vmatpush1.xpose.msra.mxu0 %v217
    %362 = vmatprep.subr.mxu0 0.0
    %363 = vmatpush1.xpose.msra.mxu0 %v220
    %364 = vmatprep.subr.mxu0 0.0
    %365 = vmatpush1.xpose.msra.mxu0 %v223
    %366 = vmatprep.subr.mxu0 0.0
    %367 = vmatpush1.xpose.msra.mxu0 %v226
    %368 = vmatprep.subr.mxu0 0.0
    %369 = vmatpush1.xpose.msra.mxu0 %v229
    %370 = vmatprep.subr.mxu0 0.0
    %371 = vmatpush1.xpose.msra.mxu0 %v232
    %372 = vmatprep.subr.mxu0 0.0
    %373 = vmatpush1.xpose.msra.mxu0 %v235
    %374 = vmatprep.subr.mxu0 0.0
    %375 = vmatpush1.xpose.msra.mxu0 %v238
    %376 = vmatprep.subr.mxu0 0.0
    %377 = vmatpush1.xpose.msra.mxu0 %v241
    %378 = vmatprep.subr.mxu0 0.0
    %379 = vmatpush1.xpose.msra.mxu0 %v244
    %380 = vmatprep.subr.mxu0 0.0
    %381 = vmatpush1.xpose.msra.mxu0 %v247
    %382 = vmatprep.subr.mxu0 0.0
    %383 = vmatpush1.xpose.msra.mxu0 %v250
    %384 = vmatprep.subr.mxu0 0.0
    %385 = vmatpush1.xpose.msra.mxu0 %v253
    %386 = vmatprep.subr.mxu0 0.0
    %387 = vmatpush1.xpose.msra.mxu0 %v256
    %388 = vmatprep.subr.mxu0 0.0
    %389 = vmatpush1.xpose.msra.mxu0 %v259
    %390 = vmatprep.subr.mxu0 0.0
    %391 = vmatpush1.xpose.msra.mxu0 %v262
    %392 = vmatprep.subr.mxu0 0.0
    %393 = vmatpush1.xpose.msra.mxu0 %v265
    %394 = vmatprep.subr.mxu0 0.0
    %395 = vmatpush1.xpose.msra.mxu0 %v268
    %396 = vmatprep.subr.mxu0 0.0
    %397 = vmatpush1.xpose.msra.mxu0 %v271
    %398 = vmatprep.subr.mxu0 0.0
    %399 = vmatpush1.xpose.msra.mxu0 %v274
    %400 = vmatprep.subr.mxu0 0.0
    %401 = vmatpush1.xpose.msra.mxu0 %v277
    %402 = vmatprep.subr.mxu0 0.0
    %403 = vmatpush1.xpose.msra.mxu0 %v280
    %404 = vmatprep.subr.mxu0 0.0
    %405 = vmatpush1.xpose.msra.mxu0 %v283
    %406 = vmatprep.subr.mxu0 0.0
    %407 = vmatpush1.xpose.msra.mxu0 %v286
    %408 = vmatprep.subr.mxu0 0.0
    %409 = vmatpush1.xpose.msra.mxu0 %v289
    %410 = vmatprep.subr.mxu0 0.0
    %411 = vmatpush1.xpose.msra.mxu0 %v292
    %412 = vmatprep.subr.mxu0 0.0
    %413 = vmatpush1.xpose.msra.mxu0 %v295
    %414 = vmatprep.subr.mxu0 0.0
    %415 = vmatpush1.xpose.msra.mxu0 %v298
    %416 = vmatprep.subr.mxu0 0.0
    %417 = vmatpush1.xpose.msra.mxu0 %v301
    %418 = vmatprep.subr.mxu0 0.0
    %419 = vmatpush1.xpose.msra.mxu0 %v304
    %420 = vmatprep.subr.mxu0 0.0
    %421 = vmatpush1.xpose.msra.mxu0 %v307
    %422 = vmatprep.subr.mxu0 0.0
    %423 = vmatpush1.xpose.msra.mxu0 %v310
    %424 = vmatprep.mubr.f32.mxu0 0.0
    %425 = vmatmul.mubr.f32.gmra.mrb[0].mxu0 %v205
    %v426 = vpop.f32.mrb[0].mxu0
    %v427 = vadd.f32 %v186, %v426
    %v428 = vpop.f32.mrb[0].mxu0
    %v429 = vadd.f32 %v186, %v428
    %430 = vmatprep.mubr.f32.mxu0 0.0
    %431 = vmatmul.mubr.f32.gmra.mrb[0].mxu0 %v208
    %v432 = vpop.f32.mrb[0].mxu0
    %v433 = vadd.f32 %v191, %v432
    %v434 = vpop.f32.mrb[0].mxu0
    %v435 = vadd.f32 %v191, %v434
    %436 = vmatprep.mubr.f32.mxu0 0.0
    %437 = vmatmul.mubr.f32.gmra.mrb[0].mxu0 %v211
    %v438 = vpop.f32.mrb[0].mxu0
    %v439 = vadd.f32 %v196, %v438
    %v440 = vpop.f32.mrb[0].mxu0
    %v441 = vadd.f32 %v196, %v440
    %442 = vmatprep.mubr.f32.mxu0 0.0
    %443 = vmatmul.mubr.f32.gmra.mrb[0].mxu0 %v214
    %v444 = vpop.f32.mrb[0].mxu0
    %v445 = vadd.f32 %v201, %v444
    %v446 = vpop.f32.mrb[0].mxu0
    %v447 = vadd.f32 %v201, %v446
    %448 = vdwg.mxu0
    %449 = vmatprep.subr.mxu0 0.0
    %450 = vmatpush1.xpose.msra.mxu0 %v313
    %451 = vmatprep.subr.mxu0 0.0
    %452 = vmatpush1.xpose.msra.mxu0 %v316
    %453 = vmatprep.subr.mxu0 0.0
    %454 = vmatpush1.xpose.msra.mxu0 %v319
    %455 = vmatprep.subr.mxu0 0.0
    %456 = vmatpush1.xpose.msra.mxu0 %v322
    %457 = vmatprep.subr.mxu0 0.0
    %458 = vmatpush1.xpose.msra.mxu0 %v325
    %459 = vmatprep.subr.mxu0 0.0
    %460 = vmatpush1.xpose.msra.mxu0 %v328
    %461 = vmatprep.subr.mxu0 0.0
    %462 = vmatpush1.xpose.msra.mxu0 %v331
    %463 = vmatprep.subr.mxu0 0.0
    %464 = vmatpush1.xpose.msra.mxu0 %v334
    %465 = vmatprep.subr.mxu0 0.0
    %466 = vmatpush1.xpose.msra.mxu0 %v337
    %467 = vmatprep.subr.mxu0 0.0
    %468 = vmatpush1.xpose.msra.mxu0 %v340
    %469 = vmatprep.subr.mxu0 0.0
    %470 = vmatpush1.xpose.msra.mxu0 %v343
    %471 = vmatprep.subr.mxu0 0.0
    %472 = vmatpush1.xpose.msra.mxu0 %v346
    %473 = vmatprep.subr.mxu0 0.0
    %474 = vmatpush1.xpose.msra.mxu0 %v349
    %475 = vmatprep.subr.mxu0 0.0
    %476 = vmatpush1.xpose.msra.mxu0 %v352
    %477 = vmatprep.subr.mxu0 0.0
    %478 = vmatpush1.xpose.msra.mxu0 %v355
    %479 = vmatprep.subr.mxu0 0.0
    %480 = vmatpush1.xpose.msra.mxu0 %v358
    %481 = vmatprep.subr.mxu0 0.0
    %482 = vmatpush1.xpose.msra.mxu0 0.0
    %483 = vmatprep.subr.mxu0 0.0
    %484 = vmatpush1.xpose.msra.mxu0 0.0
    %485 = vmatprep.subr.mxu0 0.0
    %486 = vmatpush1.xpose.msra.mxu0 0.0
    %487 = vmatprep.subr.mxu0 0.0
    %488 = vmatpush1.xpose.msra.mxu0 0.0
    %489 = vmatprep.subr.mxu0 0.0
    %490 = vmatpush1.xpose.msra.mxu0 0.0
    %491 = vmatprep.subr.mxu0 0.0
    %492 = vmatpush1.xpose.msra.mxu0 0.0
    %493 = vmatprep.subr.mxu0 0.0
    %494 = vmatpush1.xpose.msra.mxu0 0.0
    %495 = vmatprep.subr.mxu0 0.0
    %496 = vmatpush1.xpose.msra.mxu0 0.0
    %497 = vmatprep.subr.mxu0 0.0
    %498 = vmatpush1.xpose.msra.mxu0 0.0
    %499 = vmatprep.subr.mxu0 0.0
    %500 = vmatpush1.xpose.msra.mxu0 0.0
    %501 = vmatprep.subr.mxu0 0.0
    %502 = vmatpush1.xpose.msra.mxu0 0.0
    %503 = vmatprep.subr.mxu0 0.0
    %504 = vmatpush1.xpose.msra.mxu0 0.0
    %505 = vmatprep.subr.mxu0 0.0
    %506 = vmatpush1.xpose.msra.mxu0 0.0
    %507 = vmatprep.subr.mxu0 0.0
    %508 = vmatpush1.xpose.msra.mxu0 0.0
    %509 = vmatprep.subr.mxu0 0.0
    %510 = vmatpush1.xpose.msra.mxu0 0.0
    %511 = vmatprep.subr.mxu0 0.0
    %512 = vmatpush1.xpose.msra.mxu0 0.0
    %513 = vmatprep.mubr.f32.mxu0 0.0
    %514 = vmatmul.mubr.f32.gmra.mrb[0].mxu0 %v205
    %v515 = vpop.f32.mrb[0].mxu0
    %v516 = vadd.f32 %v186, %v515
    %v517 = vpop.f32.mrb[0].mxu0
    %518 = vmatprep.mubr.f32.mxu0 0.0
    %519 = vmatmul.mubr.f32.gmra.mrb[0].mxu0 %v208
    %v520 = vpop.f32.mrb[0].mxu0
    %v521 = vadd.f32 %v191, %v520
    %v522 = vpop.f32.mrb[0].mxu0
    %523 = vmatprep.mubr.f32.mxu0 0.0
    %524 = vmatmul.mubr.f32.gmra.mrb[0].mxu0 %v211
    %v525 = vpop.f32.mrb[0].mxu0
    %v526 = vadd.f32 %v196, %v525
    %v527 = vpop.f32.mrb[0].mxu0
    %528 = vmatprep.mubr.f32.mxu0 0.0
    %529 = vmatmul.mubr.f32.gmra.mrb[0].mxu0 %v214
    %v530 = vpop.f32.mrb[0].mxu0
    %v531 = vadd.f32 %v201, %v530
    %v532 = vpop.f32.mrb[0].mxu0
    %533 = vdwg.mxu0
    %v534 = vmax.f32 %v427, 0.0
    %v535 = vmax.f32 %v429, 0.0
    %v536 = vmax.f32 %v516, 0.0
    %v537 = vmax.f32 %v433, 0.0
    %v538 = vmax.f32 %v435, 0.0
    %v539 = vmax.f32 %v521, 0.0
    %v540 = vmax.f32 %v439, 0.0
    %v541 = vmax.f32 %v441, 0.0
    %v542 = vmax.f32 %v526, 0.0
    %v543 = vmax.f32 %v445, 0.0
    %v544 = vmax.f32 %v447, 0.0
    %v545 = vmax.f32 %v531, 0.0
    %v546 = vld [vmem:[%s4] sm:$0xff]
    %v547 = vld [vmem:[%s4 + $0x8] sm:$0xff]
    %v548 = vld [vmem:[%s4 + $0x10] sm:$0xff]
    %v549 = vld [vmem:[%s4 + $0x18] sm:$0xff]
    %v550 = vld [vmem:[%s5] sm:$0xff]
    %v551 = vld [vmem:[%s5 + $0x8] sm:$0xff]
    %v552 = vld [vmem:[%s5 + $0x10] sm:$0xff]
    %v553 = vld [vmem:[%s5 + $0x18] sm:$0xff]
    %555 = vset.pattern.permute.xlu0 0
    %556 = vperm.xlu0 %555, %v550
    %v557 = vpop.permute.xlu0 %556
    %560 = vset.pattern.permute.xlu0 0
    %561 = vperm.xlu0 %560, %v551
    %v562 = vpop.permute.xlu0 %561
    %565 = vset.pattern.permute.xlu0 0
    %566 = vperm.xlu0 %565, %v552
    %v567 = vpop.permute.xlu0 %566
    %570 = vset.pattern.permute.xlu0 0
    %571 = vperm.xlu0 %570, %v553
    %v572 = vpop.permute.xlu0 %571
    %v575 = vsel %vm203, %v546, 0
    %v578 = vsel %vm203, %v547, 0
    %v581 = vsel %vm203, %v548, 0
    %v584 = vsel %vm203, %v549, 0
    %586 = vmatprep.subr.mxu0 %v535
    %587 = vmatpush1.msra.mxu0 %v534
    %588 = vmatprep.subr.mxu0 %v538
    %589 = vmatpush1.msra.mxu0 %v537
    %590 = vmatprep.subr.mxu0 %v541
    %591 = vmatpush1.msra.mxu0 %v540
    %592 = vmatprep.subr.mxu0 %v544
    %593 = vmatpush1.msra.mxu0 %v543
    %594 = vmatprep.subr.mxu0 0.0
    %595 = vmatpush1.msra.mxu0 0.0
    %596 = vmatprep.subr.mxu0 0.0
    %597 = vmatpush1.msra.mxu0 0.0
    %598 = vmatprep.subr.mxu0 0.0
    %599 = vmatpush1.msra.mxu0 0.0
    %600 = vmatprep.subr.mxu0 0.0
    %601 = vmatpush1.msra.mxu0 0.0
    %602 = vmatprep.subr.mxu0 0.0
    %603 = vmatpush1.msra.mxu0 0.0
    %604 = vmatprep.subr.mxu0 0.0
    %605 = vmatpush1.msra.mxu0 0.0
    %606 = vmatprep.subr.mxu0 0.0
    %607 = vmatpush1.msra.mxu0 0.0
    %608 = vmatprep.subr.mxu0 0.0
    %609 = vmatpush1.msra.mxu0 0.0
    %610 = vmatprep.subr.mxu0 0.0
    %611 = vmatpush1.msra.mxu0 0.0
    %612 = vmatprep.subr.mxu0 0.0
    %613 = vmatpush1.msra.mxu0 0.0
    %614 = vmatprep.subr.mxu0 0.0
    %615 = vmatpush1.msra.mxu0 0.0
    %616 = vmatprep.subr.mxu0 0.0
    %617 = vmatpush1.msra.mxu0 0.0
    %618 = vmatprep.subr.mxu0 0.0
    %619 = vmatpush1.msra.mxu0 0.0
    %620 = vmatprep.subr.mxu0 0.0
    %621 = vmatpush1.msra.mxu0 0.0
    %622 = vmatprep.subr.mxu0 0.0
    %623 = vmatpush1.msra.mxu0 0.0
    %624 = vmatprep.subr.mxu0 0.0
    %625 = vmatpush1.msra.mxu0 0.0
    %626 = vmatprep.subr.mxu0 0.0
    %627 = vmatpush1.msra.mxu0 0.0
    %628 = vmatprep.subr.mxu0 0.0
    %629 = vmatpush1.msra.mxu0 0.0
    %630 = vmatprep.subr.mxu0 0.0
    %631 = vmatpush1.msra.mxu0 0.0
    %632 = vmatprep.subr.mxu0 0.0
    %633 = vmatpush1.msra.mxu0 0.0
    %634 = vmatprep.subr.mxu0 0.0
    %635 = vmatpush1.msra.mxu0 0.0
    %636 = vmatprep.subr.mxu0 0.0
    %637 = vmatpush1.msra.mxu0 0.0
    %638 = vmatprep.subr.mxu0 0.0
    %639 = vmatpush1.msra.mxu0 0.0
    %640 = vmatprep.subr.mxu0 0.0
    %641 = vmatpush1.msra.mxu0 0.0
    %642 = vmatprep.subr.mxu0 0.0
    %643 = vmatpush1.msra.mxu0 0.0
    %644 = vmatprep.subr.mxu0 0.0
    %645 = vmatpush1.msra.mxu0 0.0
    %646 = vmatprep.subr.mxu0 0.0
    %647 = vmatpush1.msra.mxu0 0.0
    %648 = vmatprep.subr.mxu0 0.0
    %649 = vmatpush1.msra.mxu0 0.0
    %650 = vmatprep.mubr.f32.mxu0 0.0
    %651 = vmatmul.mubr.f32.gmra.mrb[0].mxu0 %v575
    %v652 = vpop.f32.mrb[0].mxu0
    %v653 = vadd.f32 %v557, %v652
    %v654 = vpop.f32.mrb[0].mxu0
    %v655 = vadd.f32 %v557, %v654
    %656 = vmatprep.mubr.f32.mxu0 0.0
    %657 = vmatmul.mubr.f32.gmra.mrb[0].mxu0 %v578
    %v658 = vpop.f32.mrb[0].mxu0
    %v659 = vadd.f32 %v562, %v658
    %v660 = vpop.f32.mrb[0].mxu0
    %v661 = vadd.f32 %v562, %v660
    %662 = vmatprep.mubr.f32.mxu0 0.0
    %663 = vmatmul.mubr.f32.gmra.mrb[0].mxu0 %v581
    %v664 = vpop.f32.mrb[0].mxu0
    %v665 = vadd.f32 %v567, %v664
    %v666 = vpop.f32.mrb[0].mxu0
    %v667 = vadd.f32 %v567, %v666
    %668 = vmatprep.mubr.f32.mxu0 0.0
    %669 = vmatmul.mubr.f32.gmra.mrb[0].mxu0 %v584
    %v670 = vpop.f32.mrb[0].mxu0
    %v671 = vadd.f32 %v572, %v670
    %v672 = vpop.f32.mrb[0].mxu0
    %v673 = vadd.f32 %v572, %v672
    %674 = vdwg.mxu0
    %675 = vmatprep.subr.mxu0 0.0
    %676 = vmatpush1.msra.mxu0 %v536
    %677 = vmatprep.subr.mxu0 0.0
    %678 = vmatpush1.msra.mxu0 %v539
    %679 = vmatprep.subr.mxu0 0.0
    %680 = vmatpush1.msra.mxu0 %v542
    %681 = vmatprep.subr.mxu0 0.0
    %682 = vmatpush1.msra.mxu0 %v545
    %683 = vmatprep.subr.mxu0 0.0
    %684 = vmatpush1.msra.mxu0 0.0
    %685 = vmatprep.subr.mxu0 0.0
    %686 = vmatpush1.msra.mxu0 0.0
    %687 = vmatprep.subr.mxu0 0.0
    %688 = vmatpush1.msra.mxu0 0.0
    %689 = vmatprep.subr.mxu0 0.0
    %690 = vmatpush1.msra.mxu0 0.0
    %691 = vmatprep.subr.mxu0 0.0
    %692 = vmatpush1.msra.mxu0 0.0
    %693 = vmatprep.subr.mxu0 0.0
    %694 = vmatpush1.msra.mxu0 0.0
    %695 = vmatprep.subr.mxu0 0.0
    %696 = vmatpush1.msra.mxu0 0.0
    %697 = vmatprep.subr.mxu0 0.0
    %698 = vmatpush1.msra.mxu0 0.0
    %699 = vmatprep.subr.mxu0 0.0
    %700 = vmatpush1.msra.mxu0 0.0
    %701 = vmatprep.subr.mxu0 0.0
    %702 = vmatpush1.msra.mxu0 0.0
    %703 = vmatprep.subr.mxu0 0.0
    %704 = vmatpush1.msra.mxu0 0.0
    %705 = vmatprep.subr.mxu0 0.0
    %706 = vmatpush1.msra.mxu0 0.0
    %707 = vmatprep.subr.mxu0 0.0
    %708 = vmatpush1.msra.mxu0 0.0
    %709 = vmatprep.subr.mxu0 0.0
    %710 = vmatpush1.msra.mxu0 0.0
    %711 = vmatprep.subr.mxu0 0.0
    %712 = vmatpush1.msra.mxu0 0.0
    %713 = vmatprep.subr.mxu0 0.0
    %714 = vmatpush1.msra.mxu0 0.0
    %715 = vmatprep.subr.mxu0 0.0
    %716 = vmatpush1.msra.mxu0 0.0
    %717 = vmatprep.subr.mxu0 0.0
    %718 = vmatpush1.msra.mxu0 0.0
    %719 = vmatprep.subr.mxu0 0.0
    %720 = vmatpush1.msra.mxu0 0.0
    %721 = vmatprep.subr.mxu0 0.0
    %722 = vmatpush1.msra.mxu0 0.0
    %723 = vmatprep.subr.mxu0 0.0
    %724 = vmatpush1.msra.mxu0 0.0
    %725 = vmatprep.subr.mxu0 0.0
    %726 = vmatpush1.msra.mxu0 0.0
    %727 = vmatprep.subr.mxu0 0.0
    %728 = vmatpush1.msra.mxu0 0.0
    %729 = vmatprep.subr.mxu0 0.0
    %730 = vmatpush1.msra.mxu0 0.0
    %731 = vmatprep.subr.mxu0 0.0
    %732 = vmatpush1.msra.mxu0 0.0
    %733 = vmatprep.subr.mxu0 0.0
    %734 = vmatpush1.msra.mxu0 0.0
    %735 = vmatprep.subr.mxu0 0.0
    %736 = vmatpush1.msra.mxu0 0.0
    %737 = vmatprep.subr.mxu0 0.0
    %738 = vmatpush1.msra.mxu0 0.0
    %739 = vmatprep.mubr.f32.mxu0 0.0
    %740 = vmatmul.mubr.f32.gmra.mrb[0].mxu0 %v575
    %v741 = vpop.f32.mrb[0].mxu0
    %v742 = vadd.f32 %v557, %v741
    %v743 = vpop.f32.mrb[0].mxu0
    %744 = vmatprep.mubr.f32.mxu0 0.0
    %745 = vmatmul.mubr.f32.gmra.mrb[0].mxu0 %v578
    %v746 = vpop.f32.mrb[0].mxu0
    %v747 = vadd.f32 %v562, %v746
    %v748 = vpop.f32.mrb[0].mxu0
    %749 = vmatprep.mubr.f32.mxu0 0.0
    %750 = vmatmul.mubr.f32.gmra.mrb[0].mxu0 %v581
    %v751 = vpop.f32.mrb[0].mxu0
    %v752 = vadd.f32 %v567, %v751
    %v753 = vpop.f32.mrb[0].mxu0
    %754 = vmatprep.mubr.f32.mxu0 0.0
    %755 = vmatmul.mubr.f32.gmra.mrb[0].mxu0 %v584
    %v756 = vpop.f32.mrb[0].mxu0
    %v757 = vadd.f32 %v572, %v756
    %v758 = vpop.f32.mrb[0].mxu0
    %759 = vdwg.mxu0
    %v760 = vmax.f32 %v653, 0.0
    %v761 = vmax.f32 %v655, 0.0
    %v762 = vmax.f32 %v742, 0.0
    %v763 = vmax.f32 %v659, 0.0
    %v764 = vmax.f32 %v661, 0.0
    %v765 = vmax.f32 %v747, 0.0
    %v766 = vmax.f32 %v665, 0.0
    %v767 = vmax.f32 %v667, 0.0
    %v768 = vmax.f32 %v752, 0.0
    %v769 = vmax.f32 %v671, 0.0
    %v770 = vmax.f32 %v673, 0.0
    %v771 = vmax.f32 %v757, 0.0
    %v772 = vld [vmem:[%s6] sm:$0xff]
    %v774 = vsel %vm203, %v772, 0
    %776 = vmatprep.subr.mxu0 %v761
    %777 = vmatpush1.msra.mxu0 %v760
    %778 = vmatprep.subr.mxu0 %v764
    %779 = vmatpush1.msra.mxu0 %v763
    %780 = vmatprep.subr.mxu0 %v767
    %781 = vmatpush1.msra.mxu0 %v766
    %782 = vmatprep.subr.mxu0 %v770
    %783 = vmatpush1.msra.mxu0 %v769
    %784 = vmatprep.subr.mxu0 0.0
    %785 = vmatpush1.msra.mxu0 0.0
    %786 = vmatprep.subr.mxu0 0.0
    %787 = vmatpush1.msra.mxu0 0.0
    %788 = vmatprep.subr.mxu0 0.0
    %789 = vmatpush1.msra.mxu0 0.0
    %790 = vmatprep.subr.mxu0 0.0
    %791 = vmatpush1.msra.mxu0 0.0
    %792 = vmatprep.subr.mxu0 0.0
    %793 = vmatpush1.msra.mxu0 0.0
    %794 = vmatprep.subr.mxu0 0.0
    %795 = vmatpush1.msra.mxu0 0.0
    %796 = vmatprep.subr.mxu0 0.0
    %797 = vmatpush1.msra.mxu0 0.0
    %798 = vmatprep.subr.mxu0 0.0
    %799 = vmatpush1.msra.mxu0 0.0
    %800 = vmatprep.subr.mxu0 0.0
    %801 = vmatpush1.msra.mxu0 0.0
    %802 = vmatprep.subr.mxu0 0.0
    %803 = vmatpush1.msra.mxu0 0.0
    %804 = vmatprep.subr.mxu0 0.0
    %805 = vmatpush1.msra.mxu0 0.0
    %806 = vmatprep.subr.mxu0 0.0
    %807 = vmatpush1.msra.mxu0 0.0
    %808 = vmatprep.subr.mxu0 0.0
    %809 = vmatpush1.msra.mxu0 0.0
    %810 = vmatprep.subr.mxu0 0.0
    %811 = vmatpush1.msra.mxu0 0.0
    %812 = vmatprep.subr.mxu0 0.0
    %813 = vmatpush1.msra.mxu0 0.0
    %814 = vmatprep.subr.mxu0 0.0
    %815 = vmatpush1.msra.mxu0 0.0
    %816 = vmatprep.subr.mxu0 0.0
    %817 = vmatpush1.msra.mxu0 0.0
    %818 = vmatprep.subr.mxu0 0.0
    %819 = vmatpush1.msra.mxu0 0.0
    %820 = vmatprep.subr.mxu0 0.0
    %821 = vmatpush1.msra.mxu0 0.0
    %822 = vmatprep.subr.mxu0 0.0
    %823 = vmatpush1.msra.mxu0 0.0
    %824 = vmatprep.subr.mxu0 0.0
    %825 = vmatpush1.msra.mxu0 0.0
    %826 = vmatprep.subr.mxu0 0.0
    %827 = vmatpush1.msra.mxu0 0.0
    %828 = vmatprep.subr.mxu0 0.0
    %829 = vmatpush1.msra.mxu0 0.0
    %830 = vmatprep.subr.mxu0 0.0
    %831 = vmatpush1.msra.mxu0 0.0
    %832 = vmatprep.subr.mxu0 0.0
    %833 = vmatpush1.msra.mxu0 0.0
    %834 = vmatprep.subr.mxu0 0.0
    %835 = vmatpush1.msra.mxu0 0.0
    %836 = vmatprep.subr.mxu0 0.0
    %837 = vmatpush1.msra.mxu0 0.0
    %838 = vmatprep.subr.mxu0 0.0
    %839 = vmatpush1.msra.mxu0 0.0
    %840 = vmatprep.mubr.f32.mxu0 0.0
    %841 = vmatmul.mubr.f32.gmra.mrb[0].mxu0 %v774
    %v842 = vpop.f32.mrb[0].mxu0
    %v843 = vadd.f32 0.0, %v842
    %v844 = vpop.f32.mrb[0].mxu0
    %v845 = vadd.f32 0.0, %v844
    %846 = vdwg.mxu0
    %847 = vmatprep.subr.mxu0 0.0
    %848 = vmatpush1.msra.mxu0 %v762
    %849 = vmatprep.subr.mxu0 0.0
    %850 = vmatpush1.msra.mxu0 %v765
    %851 = vmatprep.subr.mxu0 0.0
    %852 = vmatpush1.msra.mxu0 %v768
    %853 = vmatprep.subr.mxu0 0.0
    %854 = vmatpush1.msra.mxu0 %v771
    %855 = vmatprep.subr.mxu0 0.0
    %856 = vmatpush1.msra.mxu0 0.0
    %857 = vmatprep.subr.mxu0 0.0
    %858 = vmatpush1.msra.mxu0 0.0
    %859 = vmatprep.subr.mxu0 0.0
    %860 = vmatpush1.msra.mxu0 0.0
    %861 = vmatprep.subr.mxu0 0.0
    %862 = vmatpush1.msra.mxu0 0.0
    %863 = vmatprep.subr.mxu0 0.0
    %864 = vmatpush1.msra.mxu0 0.0
    %865 = vmatprep.subr.mxu0 0.0
    %866 = vmatpush1.msra.mxu0 0.0
    %867 = vmatprep.subr.mxu0 0.0
    %868 = vmatpush1.msra.mxu0 0.0
    %869 = vmatprep.subr.mxu0 0.0
    %870 = vmatpush1.msra.mxu0 0.0
    %871 = vmatprep.subr.mxu0 0.0
    %872 = vmatpush1.msra.mxu0 0.0
    %873 = vmatprep.subr.mxu0 0.0
    %874 = vmatpush1.msra.mxu0 0.0
    %875 = vmatprep.subr.mxu0 0.0
    %876 = vmatpush1.msra.mxu0 0.0
    %877 = vmatprep.subr.mxu0 0.0
    %878 = vmatpush1.msra.mxu0 0.0
    %879 = vmatprep.subr.mxu0 0.0
    %880 = vmatpush1.msra.mxu0 0.0
    %881 = vmatprep.subr.mxu0 0.0
    %882 = vmatpush1.msra.mxu0 0.0
    %883 = vmatprep.subr.mxu0 0.0
    %884 = vmatpush1.msra.mxu0 0.0
    %885 = vmatprep.subr.mxu0 0.0
    %886 = vmatpush1.msra.mxu0 0.0
    %887 = vmatprep.subr.mxu0 0.0
    %888 = vmatpush1.msra.mxu0 0.0
    %889 = vmatprep.subr.mxu0 0.0
    %890 = vmatpush1.msra.mxu0 0.0
    %891 = vmatprep.subr.mxu0 0.0
    %892 = vmatpush1.msra.mxu0 0.0
    %893 = vmatprep.subr.mxu0 0.0
    %894 = vmatpush1.msra.mxu0 0.0
    %895 = vmatprep.subr.mxu0 0.0
    %896 = vmatpush1.msra.mxu0 0.0
    %897 = vmatprep.subr.mxu0 0.0
    %898 = vmatpush1.msra.mxu0 0.0
    %899 = vmatprep.subr.mxu0 0.0
    %900 = vmatpush1.msra.mxu0 0.0
    %901 = vmatprep.subr.mxu0 0.0
    %902 = vmatpush1.msra.mxu0 0.0
    %903 = vmatprep.subr.mxu0 0.0
    %904 = vmatpush1.msra.mxu0 0.0
    %905 = vmatprep.subr.mxu0 0.0
    %906 = vmatpush1.msra.mxu0 0.0
    %907 = vmatprep.subr.mxu0 0.0
    %908 = vmatpush1.msra.mxu0 0.0
    %909 = vmatprep.subr.mxu0 0.0
    %910 = vmatpush1.msra.mxu0 0.0
    %911 = vmatprep.mubr.f32.mxu0 0.0
    %912 = vmatmul.mubr.f32.gmra.mrb[0].mxu0 %v774
    %v913 = vpop.f32.mrb[0].mxu0
    %v914 = vadd.f32 0.0, %v913
    %v915 = vpop.f32.mrb[0].mxu0
    %916 = vdwg.mxu0
    %s917 = sld [smem:[#allocation2]]
    %v918 = vstv %s917
    %v919 = vadd.f32 %v843, %v918
    %v920 = vadd.f32 %v845, %v918
    %v921 = vadd.f32 %v914, %v918
    %v925 = vcombine.low %v919, %v920
    %v927 = vunpack.c.l.s4 1966171168
    %v928 = vunpack.c.0.s8 %v927
    %v929 = vlaneseq
    %v930 = vshrl.u32 %v929, 7
    %v931 = vsub.s32 %v928, %v930
    %v932 = vrot.slane %v925, %v931
    %v934 = vunpack.c.l.s4 1966171168
    %v935 = vunpack.c.0.s8 %v934
    %v936 = vlaneseq
    %v937 = vshrl.u32 %v936, 7
    %v938 = vsub.s32 %v935, %v937
    %v939 = vrot.slane %v921, %v938
    %v940 = vcombine.low %v932, %v939
    %v942 = vunpack.c.l.s4 1966171168
    %v943 = vunpack.c.0.s8 %v942
    %v944 = vlaneseq
    %v945 = vshrl.u32 %v944, 7
    %v946 = vsub.s32 %v943, %v945
    %v947 = vrot.slane %v940, %v946
    %v949 = vlaneseq
    %vm950 = vcmp.ge.s32.totalorder %v949, 0
    %vm951 = vcmp.lt.s32.totalorder %v949, 384
    %vm952 = vmand %vm950, %vm951
    %953 = vst.msk [vmem:[#allocation3] sm:$0x7] %vm952, %v947
    // Predicated region
    $region34: #{tpu_custom_call.1} parent=1 // pred_check
      _
    $region35: #{tpu_custom_call.1} parent=1 // pred_check_branch
      %955 = sbr.rel (0) target = $region37
    $region36: #{tpu_custom_call.1} parent=1 // pred_region
      %s957 = ssub.s32 48, 48
      %958 = vsyncadd [#allocation4], %s957
      %s960 = sshll.u32 [#allocation3], 4
      %s961 = int_to_ptr.vmem [resolvable:$true] %s960
      %963 = dma.vmem_to_hbm [thread:$0]  %s961, 48, %s8, [#allocation4]
    $region37: #{tpu_custom_call.1} parent=1 // pred_fallthru
      _
    // Predicated region
    $region38: #{tpu_custom_call.1} parent=1 // pred_check
      _
    $region39: #{tpu_custom_call.1} parent=1 // pred_check_branch
      %965 = sbr.rel (0) target = $region41
    $region40: #{tpu_custom_call.1} parent=1 // pred_region
      %966 = dma.done [#allocation4], 48
    $region41: #{tpu_custom_call.1} parent=1 // pred_fallthru
      _
    %967 = vsyncpa [#allocation4], 1

</llo_original>
